<compile_context>
chip_gen: v7x
topology: tpu7x:2x2x1
jax: 0.10.0
libtpu: 0.0.40
codegen_flags: <defaults>
</compile_context>

<pallas_src>
import jax
import jax.numpy as jnp
from jax.experimental import pallas as pl
from jax.experimental.pallas import tpu as pltpu


def _round_up(x: int, m: int) -> int:
    return ((x + m - 1) // m) * m


# ---------------------------------------------------------------------------
# Kernels
# ---------------------------------------------------------------------------
def _linear_kernel_full_k(x_ref, w_ref, b_ref, o_ref):
    """One (tm, tn) output tile: full-K matmul (f32 accumulate) + bias add.

    x arrives as f32 and is cast to bf16 in-kernel (hidden under the weight
    DMA); the weight is pre-cast bf16; accumulation is f32 on the MXU.
    """
    x = x_ref[...].astype(jnp.bfloat16)
    acc = jnp.dot(x, w_ref[...], preferred_element_type=jnp.float32)
    o_ref[...] = (acc + b_ref[...]).astype(o_ref.dtype)


def _linear_kernel_tiled_k(x_ref, w_ref, b_ref, o_ref, acc_ref):
    """Fallback for huge input_dim: K grid axis + resident f32 accumulator."""
    k = pl.program_id(2)

    @pl.when(k == 0)
    def _():
        acc_ref[...] = jnp.zeros_like(acc_ref)

    acc_ref[...] += jnp.dot(x_ref[...].astype(jnp.bfloat16), w_ref[...],
                            preferred_element_type=jnp.float32)

    @pl.when(k == pl.num_programs(2) - 1)
    def _():
        o_ref[...] = (acc_ref[...] + b_ref[...]).astype(o_ref.dtype)


# ---------------------------------------------------------------------------
# Tile selection / wrapper
# ---------------------------------------------------------------------------
_VMEM_BUDGET = 44 * 1024 * 1024   # buffer budget; v7x physical VMEM = 64 MiB
_TILED_K = 512                    # K tile used by the rare fallback path


def _full_k_vmem_bytes(tm, tn, k_pad):
    # double-buffered: x block (f32) + weight block (bf16) + bias + output (f32)
    return (2 * tm * k_pad * 4 + 2 * k_pad * tn * 2
            + 2 * tn * 4 + 2 * tm * tn * 4)


def _select_tiles(M, K, N):
    k_pad = _round_up(K, 128)
    # Lane-dense N tile (multiple of 128).  256 gives >= 4 N grid steps for
    # realistic heads (N >= 1000) so the weight-DMA pipeline has a steady
    # state and each v7x TensorCore gets >= 2 tiles.
    tn = min(256, _round_up(N, 128))
    m8 = _round_up(M, 8)

    # Prefer the largest M tile that fits the VMEM budget.  Shrinking tm costs
    # no extra HBM traffic because the grid order keeps the weight resident
    # across consecutive M steps.
    tm = None
    for cap in (1024, 512, 256, 128):
        cand = min(m8, cap)
        if _full_k_vmem_bytes(cand, tn, k_pad) <= _VMEM_BUDGET:
            tm = cand
            break
        if cand <= 128:
            break
    if tm is None:
        tm = min(m8, 128)
        while _full_k_vmem_bytes(tm, tn, k_pad) > _VMEM_BUDGET and tn > 128:
            tn = max(128, tn // 2)

    use_full_k = _full_k_vmem_bytes(tm, tn, k_pad) <= _VMEM_BUDGET
    if not use_full_k:
        k_pad = _round_up(K, _TILED_K)
    m_pad = _round_up(m8, tm)
    n_pad = _round_up(N, tn)
    return tm, tn, k_pad, m_pad, n_pad, use_full_k


@jax.jit
def pallas_linear(x, w_t_bf16, b2d):
    """y = x @ w_t + b with x:(M,K) f32, w_t_bf16:(K,N) bf16, b2d:(1,N) f32."""
    M, K = x.shape
    K_w, N = w_t_bf16.shape
    assert K == K_w, "input_dim mismatch between activations and weight"
    out_dtype = x.dtype

    tm, tn, K_pad, M_pad, N_pad, use_full_k = _select_tiles(M, K, N)

    # ---- pad operands only when misaligned (cheap glue, fused by XLA) ------
    x_p = x
    if (M_pad, K_pad) != (M, K):
        x_p = jnp.pad(x, ((0, M_pad - M), (0, K_pad - K)))
    w_p = w_t_bf16
    if (K_pad, N_pad) != (K, N):
        w_p = jnp.pad(w_t_bf16, ((0, K_pad - K), (0, N_pad - N)))
    b_p = b2d
    if N_pad != N:
        b_p = jnp.pad(b2d, ((0, 0), (0, N_pad - N)))

    n_m, n_n = M_pad // tm, N_pad // tn
    x_bytes = x.dtype.itemsize
    o_bytes = jnp.dtype(out_dtype).itemsize

    if use_full_k:
        vmem_needed = _full_k_vmem_bytes(tm, tn, K_pad)
        vmem_limit = min(int(vmem_needed * 1.2) + (4 << 20), 56 << 20)
        cost = pl.CostEstimate(
            flops=2 * M_pad * N_pad * K_pad,
            transcendentals=0,
            bytes_accessed=(M_pad * K_pad * x_bytes      # x: one pass (f32)
                            + K_pad * N_pad * 2          # weight: exactly once
                            + N_pad * 4                  # bias
                            + M_pad * N_pad * o_bytes),  # output
        )
        # Grid ordered (N, M) with M fastest: the weight/bias block index
        # (0, j) is constant across consecutive steps -> no re-DMA per M tile.
        y_pad = pl.pallas_call(
            _linear_kernel_full_k,
            out_shape=jax.ShapeDtypeStruct((M_pad, N_pad), out_dtype),
            grid_spec=pltpu.PrefetchScalarGridSpec(
                num_scalar_prefetch=0,
                grid=(n_n, n_m),
                in_specs=[
                    pl.BlockSpec((tm, K_pad), lambda j, i: (i, 0)),   # x
                    pl.BlockSpec((K_pad, tn), lambda j, i: (0, j)),   # weight
                    pl.BlockSpec((1, tn), lambda j, i: (0, j)),       # bias
                ],
                out_specs=pl.BlockSpec((tm, tn), lambda j, i: (i, j)),
            ),
            compiler_params=pltpu.CompilerParams(
                # N axis parallel (megacore splits weight tiles, no duplicated
                # HBM traffic); M axis arbitrary so cores never re-stream the
                # same weight tile.
                dimension_semantics=("parallel", "arbitrary"),
                vmem_limit_bytes=vmem_limit,
            ),
            cost_estimate=cost,
        )(x_p, w_p, b_p)
    else:
        # Rare path: input_dim so large (~>30k) that even a (128, K) f32 x
        # block + (K, 128) bf16 weight slab exceeds the v7x VMEM budget.
        # TODO(synk): weight is re-streamed once per M tile on this path.
        n_k = K_pad // _TILED_K
        cost = pl.CostEstimate(
            flops=2 * M_pad * N_pad * K_pad,
            transcendentals=0,
            bytes_accessed=(n_n * M_pad * K_pad * x_bytes
                            + n_m * K_pad * N_pad * 2
                            + N_pad * 4
                            + M_pad * N_pad * o_bytes),
        )
        y_pad = pl.pallas_call(
            _linear_kernel_tiled_k,
            out_shape=jax.ShapeDtypeStruct((M_pad, N_pad), out_dtype),
            grid_spec=pltpu.PrefetchScalarGridSpec(
                num_scalar_prefetch=0,
                grid=(n_m, n_n, n_k),
                in_specs=[
                    pl.BlockSpec((tm, _TILED_K), lambda i, j, k: (i, k)),
                    pl.BlockSpec((_TILED_K, tn), lambda i, j, k: (k, j)),
                    pl.BlockSpec((1, tn), lambda i, j, k: (0, j)),
                ],
                out_specs=pl.BlockSpec((tm, tn), lambda i, j, k: (i, j)),
                scratch_shapes=[pltpu.VMEM((tm, tn), jnp.float32)],
            ),
            compiler_params=pltpu.CompilerParams(
                dimension_semantics=("parallel", "parallel", "arbitrary"),
                vmem_limit_bytes=32 << 20,
            ),
            cost_estimate=cost,
        )(x_p, w_p, b_p)

    return y_pad[:M, :N]


# ---------------------------------------------------------------------------
# Module
# ---------------------------------------------------------------------------
class LinearClassifier:
    """JAX/Pallas reimplementation of the PyTorch LinearClassifier module."""

    def __init__(self, input_dim, num_classes=1000, simsiam_initialization=True,
                 key=None):
        if key is None:
            key = jax.random.PRNGKey(0)
        wkey, bkey = jax.random.split(key)
        if simsiam_initialization:
            # fc.weight ~ N(0, 0.01), fc.bias = 0
            self.weight = 0.01 * jax.random.normal(
                wkey, (num_classes, input_dim), dtype=jnp.float32
            )
            self.bias = jnp.zeros((num_classes,), dtype=jnp.float32)
        else:
            # default nn.Linear init (kaiming-uniform-ish); deterministic uniform
            bound = 1.0 / (input_dim ** 0.5)
            self.weight = jax.random.uniform(
                wkey, (num_classes, input_dim), jnp.float32, -bound, bound
            )
            self.bias = jax.random.uniform(
                bkey, (num_classes,), jnp.float32, -bound, bound
            )
        # Glue done once at init: transpose so the kernel output is lane-dense
        # over num_classes, and pre-cast the weight to bf16 for the MXU.
        self.w_t_bf16 = jnp.transpose(self.weight).astype(jnp.bfloat16)
        self.b2d = self.bias.reshape(1, -1)              # (1, num_classes) f32

    def projection(self, x):
        return pallas_linear(x, self.w_t_bf16, self.b2d)

    def __call__(self, input_dict):
        # mirror the PyTorch forward: mutate/augment the dict in place
        for key, value in list(input_dict.items()):
            if "encoder_image" in key:
                input_dict[key.replace("encoder", "projection")] = self.projection(value)
        return input_dict


if __name__ == "__main__":
    # Small shapes consistent with the module; deliberately unaligned so the
    # wrapper padding path (K 40->128, N 120->128) is exercised.
    batch, input_dim, num_classes = 8, 40, 120

    key = jax.random.PRNGKey(0)
    k_model, k_x = jax.random.split(key)

    model = LinearClassifier(input_dim, num_classes=num_classes,
                             simsiam_initialization=True, key=k_model)

    x = jax.random.normal(k_x, (batch, input_dim), dtype=jnp.float32)
    inputs = {"encoder_image": x}

    out = model(inputs)
    y = jax.block_until_ready(out["projection_image"])
    assert y.shape == (batch, num_classes)
    assert "encoder_image" in out  # original entry preserved

    # Tight check against a reference with the same bf16-operand / f32-accum
    # recipe, and a loose check against the pure-f32 math.
    y_ref_bf16 = (
        jnp.dot(x.astype(jnp.bfloat16), model.w_t_bf16,
                preferred_element_type=jnp.float32)
        + model.bias
    )
    y_ref_f32 = x @ model.weight.T + model.bias
    assert jnp.allclose(y, y_ref_bf16, atol=1e-4, rtol=1e-4)
    assert jnp.allclose(y, y_ref_f32, atol=1e-2, rtol=1e-2)

    print("KERNEL_OK")
</pallas_src>

<mosaic_0001>
module attributes {stable_mosaic.version = 11 : i64} {
  func.func @_linear_kernel_full_k(%arg0: i32, %arg1: i32, %arg2: memref<8x128xf32, #tpu.memory_space<vmem>>, %arg3: memref<128x128xbf16, #tpu.memory_space<vmem>>, %arg4: memref<1x128xf32, #tpu.memory_space<vmem>>, %arg5: memref<8x128xf32, #tpu.memory_space<vmem>>) attributes {dimension_semantics = [#tpu.dimension_semantics<parallel>, #tpu.dimension_semantics<arbitrary>], iteration_bounds = array<i64: 1, 1>, scalar_prefetch = 0 : i64, scratch_operands = 0 : i64, tpu.core_type = #tpu.core_type<tc>, window_params = [{transform_indices = @transform_0, window_bounds = array<i64: 8, 128>}, {transform_indices = @transform_1, window_bounds = array<i64: 128, 128>}, {transform_indices = @transform_2, window_bounds = array<i64: 1, 128>}, {transform_indices = @transform_3, window_bounds = array<i64: 8, 128>}]} {
    %c0 = arith.constant 0 : index
    %c0_0 = arith.constant 0 : index
    %0 = vector.load %arg2[%c0, %c0_0] : memref<8x128xf32, #tpu.memory_space<vmem>>, vector<8x128xf32>
    %1 = arith.truncf %0 : vector<8x128xf32> to vector<8x128xbf16>
    %c0_1 = arith.constant 0 : index
    %c0_2 = arith.constant 0 : index
    %2 = vector.load %arg3[%c0_1, %c0_2] : memref<128x128xbf16, #tpu.memory_space<vmem>>, vector<128x128xbf16>
    %cst = arith.constant dense<0.000000e+00> : vector<8x128xf32>
    %3 = tpu.matmul %1, %2, %cst {dimension_numbers = #tpu.dot_dimension_numbers<[1], [0], [0], [1], [0, 0, 1, 1], [], []>} : vector<8x128xbf16>, vector<128x128xbf16>, vector<8x128xf32> -> vector<8x128xf32>
    %c0_3 = arith.constant 0 : index
    %c0_4 = arith.constant 0 : index
    %4 = vector.load %arg4[%c0_3, %c0_4] : memref<1x128xf32, #tpu.memory_space<vmem>>, vector<1x128xf32>
    %5 = vector.broadcast %4 : vector<1x128xf32> to vector<8x128xf32>
    %6 = arith.addf %3, %5 : vector<8x128xf32>
    %c0_5 = arith.constant 0 : index
    %c0_6 = arith.constant 0 : index
    %7 = vector.load %arg5[%c0_5, %c0_6] : memref<8x128xf32, #tpu.memory_space<vmem>>, vector<8x128xf32>
    tpu.vector_store %arg5[%c0_5, %c0_6], %6 {strides = array<i32>} : memref<8x128xf32, #tpu.memory_space<vmem>>, vector<8x128xf32>,
    return
  }
  func.func @transform_0(%arg0: i32, %arg1: i32) -> (i32, i32) {
    %c0_i32 = arith.constant 0 : i32
    %c0_i32_0 = arith.constant 0 : i32
    return %arg1, %c0_i32 : i32, i32
  }
  func.func @transform_1(%arg0: i32, %arg1: i32) -> (i32, i32) {
    %c0_i32 = arith.constant 0 : i32
    %c0_i32_0 = arith.constant 0 : i32
    return %c0_i32, %arg0 : i32, i32
  }
  func.func @transform_2(%arg0: i32, %arg1: i32) -> (i32, i32) {
    %c0_i32 = arith.constant 0 : i32
    %c0_i32_0 = arith.constant 0 : i32
    return %c0_i32, %arg0 : i32, i32
  }
  func.func @transform_3(%arg0: i32, %arg1: i32) -> (i32, i32) {
    %c0_i32 = arith.constant 0 : i32
    return %arg1, %arg0 : i32, i32
  }
}

</mosaic_0001>

<llo_original>
// kernel: pallas_linear.1
$region0: #{pallas_linear.1}
  #allocation0 [shape = 'u32[]', space=smem, size = 0x4, offset = 0x4, fixed_abs, tag = 'smem constant byte address 0x4 - core index']
  #allocation1 [shape = 'u32[144,128]{1,0:T(1,128)}', space=vmem, size = 0x12000, scoped, tag = 'internal scratch']
  %s0 = inlined_call_operand.vmem [shape: f32[8,128], index: 0, kind: input, shape index: {}]
  %s1 = inlined_call_operand.vmem [shape: bf16[128,128], index: 1, kind: input, shape index: {}]
  %s2 = inlined_call_operand.vmem [shape: f32[1,128], index: 2, kind: input, shape index: {}]
  %s3 = inlined_call_operand.hbm [shape: f32[8,128], index: 3, kind: output, shape index: {}]
  %s4 = sld [smem:[#allocation0]]
  $region22: #{pallas_linear.1} parent=0
    _
  %s6 = ssub.s32 1, %s4
  %s7 = scalar_select 0, %s6, %s4
  $region1: #{pallas_linear.1} parent=0
    #allocation2 [shape = 'u8[4096]{0}', space=vmem, size = 0x1000, scoped, tag = 'output window, operand 0, single buffered']
    #allocation3 [shape = 's32[1]{0}', space=sflag, size = 0x4, scoped, tag = 'scoped memory for pallas_linear.1']
    %8 = vsyncpa [#allocation3], 0
    // Predicated region
    $region2: #{pallas_linear.1} parent=1 // pred_check
      _
    $region3: #{pallas_linear.1} parent=1 // pred_check_branch
      %10 = sbr.rel (0) target = $region5
    $region4: #{pallas_linear.1} parent=1 // pred_region
      _
    $region5: #{pallas_linear.1} parent=1 // pred_fallthru
      _
    // Predicated region
    $region6: #{pallas_linear.1} parent=1 // pred_check
      _
    $region7: #{pallas_linear.1} parent=1 // pred_check_branch
      %12 = sbr.rel (0) target = $region9
    $region8: #{pallas_linear.1} parent=1 // pred_region
      _
    $region9: #{pallas_linear.1} parent=1 // pred_fallthru
      _
    // Predicated region
    $region10: #{pallas_linear.1} parent=1 // pred_check
      _
    $region11: #{pallas_linear.1} parent=1 // pred_check_branch
      %14 = sbr.rel (0) target = $region13
    $region12: #{pallas_linear.1} parent=1 // pred_region
      _
    $region13: #{pallas_linear.1} parent=1 // pred_fallthru
      _
    %v16 = vld [vmem:[%s0] sm:$0xff]
    %v17 = vpack.c.bf16 %v16, %v16
    %v18 = vld [vmem:[%s1] sm:$0xf]
    %v19 = vld [vmem:[%s1 + $0x4] sm:$0xf]
    %v20 = vld [vmem:[%s1 + $0x8] sm:$0xf]
    %v21 = vld [vmem:[%s1 + $0xc] sm:$0xf]
    %v22 = vld [vmem:[%s1 + $0x10] sm:$0xf]
    %v23 = vld [vmem:[%s1 + $0x14] sm:$0xf]
    %v24 = vld [vmem:[%s1 + $0x18] sm:$0xf]
    %v25 = vld [vmem:[%s1 + $0x1c] sm:$0xf]
    %v26 = vld [vmem:[%s1 + $0x20] sm:$0xf]
    %v27 = vld [vmem:[%s1 + $0x24] sm:$0xf]
    %v28 = vld [vmem:[%s1 + $0x28] sm:$0xf]
    %v29 = vld [vmem:[%s1 + $0x2c] sm:$0xf]
    %v30 = vld [vmem:[%s1 + $0x30] sm:$0xf]
    %v31 = vld [vmem:[%s1 + $0x34] sm:$0xf]
    %v32 = vld [vmem:[%s1 + $0x38] sm:$0xf]
    %v33 = vld [vmem:[%s1 + $0x3c] sm:$0xf]
    %v34 = vld [vmem:[%s2] sm:$0x1]
    %v36 = vlaneseq
    %v37 = vshrl.u32 %v36, 7
    %v38 = vsub.s32 0, %v37
    %v39 = vrot.slane %v34, %v38
    %v57 = vunpack.c.l.b16 %v18
    %v58 = vunpack.c.l.b16 %v19
    %v59 = vunpack.c.l.b16 %v20
    %v60 = vunpack.c.l.b16 %v21
    %v61 = vunpack.c.l.b16 %v22
    %v62 = vunpack.c.l.b16 %v23
    %v63 = vunpack.c.l.b16 %v24
    %v64 = vunpack.c.l.b16 %v25
    %v65 = vunpack.c.l.b16 %v26
    %v66 = vunpack.c.l.b16 %v27
    %v67 = vunpack.c.l.b16 %v28
    %v68 = vunpack.c.l.b16 %v29
    %v69 = vunpack.c.l.b16 %v30
    %v70 = vunpack.c.l.b16 %v31
    %v71 = vunpack.c.l.b16 %v32
    %v72 = vunpack.c.l.b16 %v33
    %v73 = vpack.c.b16 %v58, %v57
    %v74 = vpack.c.b16 %v60, %v59
    %v75 = vpack.c.b16 %v62, %v61
    %v76 = vpack.c.b16 %v64, %v63
    %v77 = vpack.c.b16 %v66, %v65
    %v78 = vpack.c.b16 %v68, %v67
    %v79 = vpack.c.b16 %v70, %v69
    %v80 = vpack.c.b16 %v72, %v71
    %89 = vmatprep.subr.bf16.mxu0 0
    %90 = vmatpush1.bf16.msra.mxu0 %v73
    %91 = vmatprep.subr.bf16.mxu0 0
    %92 = vmatpush1.bf16.msra.mxu0 %v74
    %93 = vmatprep.subr.bf16.mxu0 0
    %94 = vmatpush1.bf16.msra.mxu0 %v75
    %95 = vmatprep.subr.bf16.mxu0 0
    %96 = vmatpush1.bf16.msra.mxu0 %v76
    %97 = vmatprep.subr.bf16.mxu0 0
    %98 = vmatpush1.bf16.msra.mxu0 %v77
    %99 = vmatprep.subr.bf16.mxu0 0
    %100 = vmatpush1.bf16.msra.mxu0 %v78
    %101 = vmatprep.subr.bf16.mxu0 0
    %102 = vmatpush1.bf16.msra.mxu0 %v79
    %103 = vmatprep.subr.bf16.mxu0 0
    %104 = vmatpush1.bf16.msra.mxu0 %v80
    %105 = vmatprep.subr.bf16.mxu0 0
    %106 = vmatpush1.bf16.msra.mxu0 0
    %107 = vmatprep.subr.bf16.mxu0 0
    %108 = vmatpush1.bf16.msra.mxu0 0
    %109 = vmatprep.subr.bf16.mxu0 0
    %110 = vmatpush1.bf16.msra.mxu0 0
    %111 = vmatprep.subr.bf16.mxu0 0
    %112 = vmatpush1.bf16.msra.mxu0 0
    %113 = vmatprep.subr.bf16.mxu0 0
    %114 = vmatpush1.bf16.msra.mxu0 0
    %115 = vmatprep.subr.bf16.mxu0 0
    %116 = vmatpush1.bf16.msra.mxu0 0
    %117 = vmatprep.subr.bf16.mxu0 0
    %118 = vmatpush1.bf16.msra.mxu0 0
    %119 = vmatprep.subr.bf16.mxu0 0
    %120 = vmatpush1.bf16.msra.mxu0 0
    %121 = vmatprep.mubr.bf16.mxu0 0
    %122 = vmatmul.mubr.bf16.gmra.mrb[0].mxu0 %v17
    %v123 = vpop.f32.mrb[0].mxu0
    %v124 = vadd.f32 %v39, %v123
    %v125 = vpop.f32.mrb[0].mxu0
    %v126 = vpop.f32.mrb[0].mxu0
    %v127 = vpop.f32.mrb[0].mxu0
    %128 = vdwg.mxu0
    %129 = vst [vmem:[#allocation2] sm:$0xff] %v124
    // Predicated region
    $region14: #{pallas_linear.1} parent=1 // pred_check
      _
    $region15: #{pallas_linear.1} parent=1 // pred_check_branch
      %131 = sbr.rel (0) target = $region17
    $region16: #{pallas_linear.1} parent=1 // pred_region
      %s133 = ssub.s32 128, 128
      %134 = vsyncadd [#allocation3], %s133
      %s136 = sshll.u32 [#allocation2], 4
      %s137 = int_to_ptr.vmem [resolvable:$true] %s136
      %139 = dma.vmem_to_hbm [thread:$0]  %s137, 128, %s3, [#allocation3]
    $region17: #{pallas_linear.1} parent=1 // pred_fallthru
      _
    // Predicated region
    $region18: #{pallas_linear.1} parent=1 // pred_check
      _
    $region19: #{pallas_linear.1} parent=1 // pred_check_branch
      %141 = sbr.rel (0) target = $region21
    $region20: #{pallas_linear.1} parent=1 // pred_region
      %142 = dma.done [#allocation3], 128
    $region21: #{pallas_linear.1} parent=1 // pred_fallthru
      _
    %143 = vsyncpa [#allocation3], 1

</llo_original>
